<compile_context>
chip_gen: v7x
topology: tpu7x:2x2x1
jax: 0.10.0
libtpu: 0.0.40
codegen_flags: <defaults>
</compile_context>

<pallas_src>
import math
import functools

import jax
import jax.numpy as jnp
from jax import lax
from jax.experimental import pallas as pl
from jax.experimental.pallas import tpu as pltpu


def _round_up(n, m):
    return ((n + m - 1) // m) * m


def _normalize_rows(a):
    """F.normalize(a, dim=1, eps=1e-12) == a * rsqrt(max(sum(a*a), 1e-24))."""
    a = a.astype(jnp.float32)
    inv = lax.rsqrt(jnp.maximum(jnp.sum(a * a, axis=1, keepdims=True), 1e-24))
    return a * inv


def prepare_arc_margin_weight(weight, mxu_dtype=jnp.bfloat16):
    """Row-normalize + cast the (C, F) weight once.

    The weight is a parameter: cache this result across training steps and
    pass it with weight_is_prepared=True to skip 2 full-weight HBM passes
    (norm + cast) per call.
    """
    return _normalize_rows(weight).astype(mxu_dtype)


def _arc_margin_kernel(label_ref, x_ref, w_ref, out_ref, *,
                       scale, cos_m, sin_m, th, mm, easy_margin, ls_eps,
                       out_features, block_c):
    # One MXU contraction per grid step. Operands are already row-normalized
    # (the norm is folded into the wrapper-side cast); contracting dim 1 of
    # BOTH operands feeds the natural (C, F) weight layout to the MXU with no
    # in-kernel transpose.
    cosine = lax.dot_general(
        x_ref[...], w_ref[...],
        dimension_numbers=(((1,), (1,)), ((), ())),
        preferred_element_type=jnp.float32)                      # (tb, tc) f32

    labels = label_ref[...]                                      # (tb, 1) int32
    rel = labels - pl.program_id(0) * block_c                    # label - col0

    if ls_eps > 0.0:
        # Label smoothing mixes phi into every column -> per-element path.
        classes = lax.broadcasted_iota(jnp.int32, cosine.shape, 1)
        is_label = classes == rel
        sine = jnp.sqrt(jnp.maximum(1.0 - cosine * cosine, 0.0))
        phi = cosine * cos_m - sine * sin_m
        if easy_margin:
            phi = jnp.where(cosine > 0.0, phi, cosine)
        else:
            phi = jnp.where(cosine > th, phi, cosine - mm)
        one_hot = (1.0 - ls_eps) * is_label.astype(jnp.float32) + ls_eps / out_features
        out = one_hot * phi + (1.0 - one_hot) * cosine
        out_ref[...] = (out * scale).astype(out_ref.dtype)
    else:
        # Most class tiles contain no label of the current batch tile: gate
        # the whole margin chain behind a cheap (tb, 1) membership test.
        hit = jnp.any((rel >= 0) & (rel < block_c))

        @pl.when(hit)
        def _():
            classes = lax.broadcasted_iota(jnp.int32, cosine.shape, 1)
            is_label = classes == rel                             # (tb, tc)
            # Rank-1 margin: sqrt/where chain runs on (tb, 1), not (tb, tc).
            cos_lab = jnp.sum(jnp.where(is_label, cosine, 0.0),
                              axis=1, keepdims=True)
            sine_lab = jnp.sqrt(jnp.maximum(1.0 - cos_lab * cos_lab, 0.0))
            phi_lab = cos_lab * cos_m - sine_lab * sin_m
            if easy_margin:
                phi_lab = jnp.where(cos_lab > 0.0, phi_lab, cos_lab)
            else:
                phi_lab = jnp.where(cos_lab > th, phi_lab, cos_lab - mm)
            out = jnp.where(is_label, phi_lab, cosine)
            out_ref[...] = (out * scale).astype(out_ref.dtype)

        @pl.when(jnp.logical_not(hit))
        def _():
            out_ref[...] = (cosine * scale).astype(out_ref.dtype)


def arc_margin_product(x, weight, label, *, scale=30.0, margin=0.5,
                       easy_margin=False, ls_eps=0.0,
                       block_b=None, block_c=None,
                       mxu_dtype=jnp.bfloat16, out_dtype=jnp.float32,
                       weight_is_prepared=False):
    """ArcMarginProduct.forward(input, label) in Pallas.

    x:      (B, in_features)  float32
    weight: (out_features, in_features) float32, or the cached output of
            prepare_arc_margin_weight(...) if weight_is_prepared=True.
    label:  (B,) integer class indices
    returns (B, out_features) in out_dtype (f32 by default, bf16 optional).
    """
    B, F = x.shape
    C, F2 = weight.shape
    assert F == F2, "feature dims of input and weight must match"

    in_bpe = jnp.dtype(mxu_dtype).itemsize
    out_bpe = jnp.dtype(out_dtype).itemsize

    # VMEM budget from the actual chip (64 MiB physical on v7x, 128 MiB on
    # v5e/v6e), leaving 25% headroom for Mosaic scratch.
    try:
        vmem_cap = int(pltpu.get_tpu_info().vmem_capacity_bytes)
    except Exception:
        vmem_cap = 64 << 20          # conservative (v7x-safe) fallback
    budget = int((vmem_cap * 3) // 4)

    def vmem_need(tb_, tc_):
        return (2 * tb_ * F * in_bpe          # x tile, double-buffered
                + 2 * tc_ * F * in_bpe        # weight tile, double-buffered
                + 2 * tb_ * tc_ * out_bpe     # output tile, double-buffered
                + tb_ * tc_ * 4               # f32 cosine intermediate
                + 2 * tb_ * 4                 # label tile
                + (2 << 20))                  # misc headroom

    # Batch tile as large as VMEM allows (ideally the whole batch) -> the
    # (C, F) weight is streamed from HBM exactly once per call. Class tile
    # lane-dense (multiple of 128, up to 2048) for unmasked vst stores.
    tb = block_b if block_b is not None else min(512, _round_up(B, 8))
    tc = block_c if block_c is not None else min(2048, _round_up(C, 128))
    if block_c is None:
        while vmem_need(tb, tc) > budget and tc > 128:
            tc = max(128, _round_up(tc // 2, 128))
    if block_b is None:
        while vmem_need(tb, tc) > budget and tb > 8:
            tb = max(8, _round_up(tb // 2, 8))
    assert tb % 8 == 0, "block_b must be a multiple of 8"
    assert tc % 128 == 0, "block_c must be a multiple of 128"

    Bp = _round_up(B, tb)
    Cp = _round_up(C, tc)

    # Fold the row normalization into the MXU-dtype operands (free: the
    # wrapper materializes these casts anyway). Padded rows are zero and are
    # cropped below; padded batch rows carry label -1 (never matches).
    x_mxu = _normalize_rows(x).astype(mxu_dtype)
    if weight_is_prepared:
        w_mxu = weight.astype(mxu_dtype)
    else:
        w_mxu = prepare_arc_margin_weight(weight, mxu_dtype)
    label2d = label.astype(jnp.int32).reshape(B, 1)

    if Bp != B:
        x_mxu = jnp.pad(x_mxu, ((0, Bp - B), (0, 0)))
        label2d = jnp.pad(label2d, ((0, Bp - B), (0, 0)), constant_values=-1)
    if Cp != C:
        w_mxu = jnp.pad(w_mxu, ((0, Cp - C), (0, 0)))

    kernel = functools.partial(
        _arc_margin_kernel,
        scale=float(scale),
        cos_m=math.cos(margin),
        sin_m=math.sin(margin),
        th=math.cos(math.pi - margin),
        mm=math.sin(math.pi - margin) * margin,
        easy_margin=bool(easy_margin),
        ls_eps=float(ls_eps),
        out_features=C,
        block_c=tc,
    )

    # Grid order: class tiles outermost, batch tiles innermost (fastest), so
    # each (tc, F) weight tile stays resident across all batch tiles and is
    # DMA'd from HBM exactly once; only the small x tiles are re-streamed.
    grid = (Cp // tc, Bp // tb)

    cost = pl.CostEstimate(
        flops=2 * B * C * F,
        transcendentals=0,
        bytes_accessed=(Cp * F * in_bpe                 # weight read once
                        + (Cp // tc) * Bp * F * in_bpe  # x re-read per class tile
                        + Bp * Cp * out_bpe             # logits writeback
                        + Bp * 4))                      # labels

    out_padded = pl.pallas_call(
        kernel,
        out_shape=jax.ShapeDtypeStruct((Bp, Cp), out_dtype),
        grid=grid,
        in_specs=[
            pl.BlockSpec((tb, 1), lambda j, i: (i, 0)),   # labels  (int32)
            pl.BlockSpec((tb, F), lambda j, i: (i, 0)),   # normalized x
            pl.BlockSpec((tc, F), lambda j, i: (j, 0)),   # normalized weight
        ],
        out_specs=pl.BlockSpec((tb, tc), lambda j, i: (i, j)),
        compiler_params=pltpu.CompilerParams(
            dimension_semantics=("parallel", "parallel"),
            vmem_limit_bytes=budget),
        cost_estimate=cost,
    )(label2d, x_mxu, w_mxu)

    return out_padded[:B, :C]


def _reference(x, weight, label, scale, margin, easy_margin, ls_eps):
    xn = x / jnp.maximum(jnp.linalg.norm(x, axis=1, keepdims=True), 1e-12)
    wn = weight / jnp.maximum(jnp.linalg.norm(weight, axis=1, keepdims=True), 1e-12)
    cosine = xn @ wn.T
    sine = jnp.sqrt(jnp.maximum(1.0 - cosine ** 2, 0.0))
    phi = cosine * math.cos(margin) - sine * math.sin(margin)
    if easy_margin:
        phi = jnp.where(cosine > 0.0, phi, cosine)
    else:
        phi = jnp.where(cosine > math.cos(math.pi - margin), phi,
                        cosine - math.sin(math.pi - margin) * margin)
    one_hot = jax.nn.one_hot(label, weight.shape[0], dtype=jnp.float32)
    if ls_eps > 0:
        one_hot = (1.0 - ls_eps) * one_hot + ls_eps / weight.shape[0]
    return (one_hot * phi + (1.0 - one_hot) * cosine) * scale


if __name__ == "__main__":
    key = jax.random.PRNGKey(0)

    # ---- Small shapes: batch=8, in_features=32, out_features=128 ----
    B, IN_F, OUT_F = 8, 32, 128
    kx, kw, kl = jax.random.split(key, 3)
    x = jax.random.normal(kx, (B, IN_F), dtype=jnp.float32)
    bound = math.sqrt(6.0 / (IN_F + OUT_F))        # Xavier-uniform init
    weight = jax.random.uniform(kw, (OUT_F, IN_F), dtype=jnp.float32,
                                minval=-bound, maxval=bound)
    label = jax.random.randint(kl, (B,), 0, OUT_F, dtype=jnp.int32)
    ref = _reference(x, weight, label, 30.0, 0.5, False, 0.0)

    # 1) f32 MXU operands: tight check vs. the pure-JAX reference.
    out_f32 = arc_margin_product(x, weight, label, scale=30.0, margin=0.5,
                                 easy_margin=False, ls_eps=0.0,
                                 mxu_dtype=jnp.float32)
    jax.block_until_ready(out_f32)
    assert out_f32.shape == (B, OUT_F)
    assert jnp.allclose(out_f32, ref, atol=1e-3, rtol=1e-4), "f32 path mismatch"

    # 2) Production default: bf16 MXU operands (norm folded into the cast).
    out_bf16 = arc_margin_product(x, weight, label, scale=30.0, margin=0.5,
                                  easy_margin=False, ls_eps=0.0)
    jax.block_until_ready(out_bf16)
    assert jnp.allclose(out_bf16, ref, atol=0.5, rtol=0.0), "bf16 path mismatch"

    # 3) bf16 output dtype (halved logits writeback).
    out_bf16o = arc_margin_product(x, weight, label, scale=30.0, margin=0.5,
                                   easy_margin=False, ls_eps=0.0,
                                   out_dtype=jnp.bfloat16)
    jax.block_until_ready(out_bf16o)
    assert out_bf16o.dtype == jnp.bfloat16
    assert jnp.allclose(out_bf16o.astype(jnp.float32), ref, atol=0.5, rtol=0.0), \
        "bf16 output mismatch"

    # 4) Label-smoothing path (per-element phi branch), f32 operands.
    out_ls = arc_margin_product(x, weight, label, scale=30.0, margin=0.5,
                                easy_margin=False, ls_eps=0.1,
                                mxu_dtype=jnp.float32)
    jax.block_until_ready(out_ls)
    ref_ls = _reference(x, weight, label, 30.0, 0.5, False, 0.1)
    assert jnp.allclose(out_ls, ref_ls, atol=1e-3, rtol=1e-4), "ls_eps path mismatch"

    # 5) Multi-tile grid (forced small blocks), padded tails, pl.when gating,
    #    cached/prepared weight, easy_margin branch.
    B2, F2, C2 = 40, 64, 1000
    k2x, k2w, k2l = jax.random.split(jax.random.PRNGKey(0), 3)
    x2 = jax.random.normal(k2x, (B2, F2), dtype=jnp.float32)
    bound2 = math.sqrt(6.0 / (F2 + C2))
    w2 = jax.random.uniform(k2w, (C2, F2), dtype=jnp.float32,
                            minval=-bound2, maxval=bound2)
    lbl2 = jax.random.randint(k2l, (B2,), 0, C2, dtype=jnp.int32)
    w2_prep = prepare_arc_margin_weight(w2, mxu_dtype=jnp.float32)  # cache per step
    out_tiled = arc_margin_product(x2, w2_prep, lbl2, scale=30.0, margin=0.5,
                                   easy_margin=True, ls_eps=0.0,
                                   block_b=16, block_c=256,
                                   mxu_dtype=jnp.float32,
                                   weight_is_prepared=True)
    jax.block_until_ready(out_tiled)
    ref_tiled = _reference(x2, w2, lbl2, 30.0, 0.5, True, 0.0)
    assert out_tiled.shape == (B2, C2)
    assert jnp.allclose(out_tiled, ref_tiled, atol=1e-3, rtol=1e-4), \
        "tiled/prepared-weight path mismatch"

    print("KERNEL_OK")
</pallas_src>

<mosaic_0001>
module attributes {stable_mosaic.version = 11 : i64} {
  func.func @_arc_margin_kernel(%arg0: i32, %arg1: i32, %arg2: memref<8x1xi32, #tpu.memory_space<vmem>>, %arg3: memref<8x32xf32, #tpu.memory_space<vmem>>, %arg4: memref<128x32xf32, #tpu.memory_space<vmem>>, %arg5: memref<8x128xf32, #tpu.memory_space<vmem>>) attributes {dimension_semantics = [#tpu.dimension_semantics<parallel>, #tpu.dimension_semantics<parallel>], iteration_bounds = array<i64: 1, 1>, scalar_prefetch = 0 : i64, scratch_operands = 0 : i64, tpu.core_type = #tpu.core_type<tc>, window_params = [{transform_indices = @transform_0, window_bounds = array<i64: 8, 1>}, {transform_indices = @transform_1, window_bounds = array<i64: 8, 32>}, {transform_indices = @transform_2, window_bounds = array<i64: 128, 32>}, {transform_indices = @transform_3, window_bounds = array<i64: 8, 128>}]} {
    %c0 = arith.constant 0 : index
    %c0_0 = arith.constant 0 : index
    %0 = vector.load %arg3[%c0, %c0_0] : memref<8x32xf32, #tpu.memory_space<vmem>>, vector<8x32xf32>
    %c0_1 = arith.constant 0 : index
    %c0_2 = arith.constant 0 : index
    %1 = vector.load %arg4[%c0_1, %c0_2] : memref<128x32xf32, #tpu.memory_space<vmem>>, vector<128x32xf32>
    %cst = arith.constant dense<0.000000e+00> : vector<8x128xf32>
    %2 = tpu.matmul %0, %1, %cst {dimension_numbers = #tpu.dot_dimension_numbers<[1], [1], [0], [0], [0, 0, 1, 0], [], []>} : vector<8x32xf32>, vector<128x32xf32>, vector<8x128xf32> -> vector<8x128xf32>
    %c0_3 = arith.constant 0 : index
    %c0_4 = arith.constant 0 : index
    %3 = vector.load %arg2[%c0_3, %c0_4] : memref<8x1xi32, #tpu.memory_space<vmem>>, vector<8x1xi32>
    %c128_i32 = arith.constant 128 : i32
    %4 = arith.muli %arg0, %c128_i32 : i32
    %5 = vector.broadcast %4 : i32 to vector<8x1xi32>
    %6 = arith.subi %3, %5 : vector<8x1xi32>
    %c0_i32 = arith.constant 0 : i32
    %7 = vector.broadcast %c0_i32 : i32 to vector<8x1xi32>
    %8 = arith.cmpi sge, %6, %7 : vector<8x1xi32>
    %c128_i32_5 = arith.constant 128 : i32
    %9 = vector.broadcast %c128_i32_5 : i32 to vector<8x1xi32>
    %10 = arith.cmpi slt, %6, %9 : vector<8x1xi32>
    %11 = arith.andi %8, %10 : vector<8x1xi1>
    %cst_6 = arith.constant 1.000000e+00 : f32
    %cst_7 = arith.constant 0.000000e+00 : f32
    %12 = vector.broadcast %cst_6 : f32 to vector<8x1xf32>
    %13 = vector.broadcast %cst_7 : f32 to vector<8x1xf32>
    %14 = arith.select %11, %12, %13 : vector<8x1xi1>, vector<8x1xf32>
    %15 = vector.shape_cast %14 : vector<8x1xf32> to vector<1x8x1xf32>
    %cst_8 = arith.constant dense<0xFF800000> : vector<1xf32>
    %16 = vector.multi_reduction <maximumf>, %15, %cst_8 [1, 2] : vector<1x8x1xf32> to vector<1xf32>
    %17 = vector.shape_cast %16 : vector<1xf32> to vector<1x1x1xf32>
    %18 = vector.extract %17[0, 0, 0] : f32 from vector<1x1x1xf32>
    %cst_9 = arith.constant 0.000000e+00 : f32
    %19 = arith.cmpf ogt, %18, %cst_9 : f32
    %20 = arith.extui %19 : i1 to i32
    %c0_i32_10 = arith.constant 0 : i32
    %21 = arith.cmpi ne, %20, %c0_i32_10 : i32
    scf.if %21 {
      %25 = tpu.iota {dimensions = array<i32: 1>} : vector<8x128xi32>
      %26 = vector.broadcast %6 : vector<8x1xi32> to vector<8x128xi32>
      %27 = arith.cmpi eq, %25, %26 : vector<8x128xi32>
      %cst_12 = arith.constant 0.000000e+00 : f32
      %28 = vector.broadcast %cst_12 : f32 to vector<8x128xf32>
      %29 = arith.select %27, %2, %28 : vector<8x128xi1>, vector<8x128xf32>
      %cst_13 = arith.constant dense<0.000000e+00> : vector<8xf32>
      %30 = vector.multi_reduction <add>, %29, %cst_13 [1] : vector<8x128xf32> to vector<8xf32>
      %31 = vector.shape_cast %30 : vector<8xf32> to vector<8x1xf32>
      %32 = arith.mulf %31, %31 : vector<8x1xf32>
      %cst_14 = arith.constant 1.000000e+00 : f32
      %33 = vector.broadcast %cst_14 : f32 to vector<8x1xf32>
      %34 = arith.subf %33, %32 : vector<8x1xf32>
      %cst_15 = arith.constant 0.000000e+00 : f32
      %35 = vector.broadcast %cst_15 : f32 to vector<8x1xf32>
      %36 = arith.maximumf %34, %35 : vector<8x1xf32>
      %37 = math.sqrt %36 : vector<8x1xf32>
      %cst_16 = arith.constant 0.87758255 : f32
      %38 = vector.broadcast %cst_16 : f32 to vector<8x1xf32>
      %39 = arith.mulf %31, %38 : vector<8x1xf32>
      %cst_17 = arith.constant 0.47942555 : f32
      %40 = vector.broadcast %cst_17 : f32 to vector<8x1xf32>
      %41 = arith.mulf %37, %40 : vector<8x1xf32>
      %42 = arith.subf %39, %41 : vector<8x1xf32>
      %cst_18 = arith.constant -0.87758255 : f32
      %43 = vector.broadcast %cst_18 : f32 to vector<8x1xf32>
      %44 = arith.cmpf ogt, %31, %43 : vector<8x1xf32>
      %cst_19 = arith.constant 0.239712775 : f32
      %45 = vector.broadcast %cst_19 : f32 to vector<8x1xf32>
      %46 = arith.subf %31, %45 : vector<8x1xf32>
      %47 = arith.select %44, %42, %46 : vector<8x1xi1>, vector<8x1xf32>
      %48 = vector.shape_cast %47 : vector<8x1xf32> to vector<8x1xf32>
      %49 = vector.broadcast %48 : vector<8x1xf32> to vector<8x128xf32>
      %50 = arith.select %27, %49, %2 : vector<8x128xi1>, vector<8x128xf32>
      %cst_20 = arith.constant 3.000000e+01 : f32
      %51 = vector.broadcast %cst_20 : f32 to vector<8x128xf32>
      %52 = arith.mulf %50, %51 : vector<8x128xf32>
      %c0_21 = arith.constant 0 : index
      %c0_22 = arith.constant 0 : index
      %53 = vector.load %arg5[%c0_21, %c0_22] : memref<8x128xf32, #tpu.memory_space<vmem>>, vector<8x128xf32>
      tpu.vector_store %arg5[%c0_21, %c0_22], %52 {strides = array<i32>} : memref<8x128xf32, #tpu.memory_space<vmem>>, vector<8x128xf32>,
    } else {
    }
    %true = arith.constant true
    %22 = arith.xori %19, %true : i1
    %23 = arith.extui %22 : i1 to i32
    %c0_i32_11 = arith.constant 0 : i32
    %24 = arith.cmpi ne, %23, %c0_i32_11 : i32
    scf.if %24 {
      %cst_12 = arith.constant 3.000000e+01 : f32
      %25 = vector.broadcast %cst_12 : f32 to vector<8x128xf32>
      %26 = arith.mulf %2, %25 : vector<8x128xf32>
      %c0_13 = arith.constant 0 : index
      %c0_14 = arith.constant 0 : index
      %27 = vector.load %arg5[%c0_13, %c0_14] : memref<8x128xf32, #tpu.memory_space<vmem>>, vector<8x128xf32>
      tpu.vector_store %arg5[%c0_13, %c0_14], %26 {strides = array<i32>} : memref<8x128xf32, #tpu.memory_space<vmem>>, vector<8x128xf32>,
    } else {
    }
    return
  }
  func.func @transform_0(%arg0: i32, %arg1: i32) -> (i32, i32) {
    %c0_i32 = arith.constant 0 : i32
    %c0_i32_0 = arith.constant 0 : i32
    return %arg1, %c0_i32 : i32, i32
  }
  func.func @transform_1(%arg0: i32, %arg1: i32) -> (i32, i32) {
    %c0_i32 = arith.constant 0 : i32
    %c0_i32_0 = arith.constant 0 : i32
    return %arg1, %c0_i32 : i32, i32
  }
  func.func @transform_2(%arg0: i32, %arg1: i32) -> (i32, i32) {
    %c0_i32 = arith.constant 0 : i32
    %c0_i32_0 = arith.constant 0 : i32
    return %arg0, %c0_i32 : i32, i32
  }
  func.func @transform_3(%arg0: i32, %arg1: i32) -> (i32, i32) {
    %c0_i32 = arith.constant 0 : i32
    return %arg1, %arg0 : i32, i32
  }
}

</mosaic_0001>

<llo_original>
// kernel: tpu_custom_call.1
$region0: #{tpu_custom_call.1}
  #allocation0 [shape = 'u32[]', space=smem, size = 0x4, offset = 0x4, fixed_abs, tag = 'smem constant byte address 0x4 - core index']
  #allocation1 [shape = 'u32[144,128]{1,0:T(1,128)}', space=vmem, size = 0x12000, scoped, tag = 'internal scratch']
  %s0 = inlined_call_operand.vmem [shape: s32[8,1], index: 0, kind: input, shape index: {}]
  %s1 = inlined_call_operand.vmem [shape: f32[8,32], index: 1, kind: input, shape index: {}]
  %s2 = inlined_call_operand.vmem [shape: f32[128,32], index: 2, kind: input, shape index: {}]
  %s3 = inlined_call_operand.hbm [shape: f32[8,128], index: 3, kind: output, shape index: {}]
  %s4 = sld [smem:[#allocation0]]
  $region30: #{tpu_custom_call.1} parent=0
    _
  %s6 = ssub.s32 1, %s4
  %s7 = scalar_select 0, %s6, %s4
  $region1: #{tpu_custom_call.1} parent=0
    #allocation2 [shape = 'u8[4096]{0}', space=vmem, size = 0x1000, scoped, tag = 'output window, operand 0, single buffered']
    #allocation3 [shape = 's32[1]{0}', space=sflag, size = 0x4, scoped, tag = 'scoped memory for tpu_custom_call.1']
    %8 = vsyncpa [#allocation3], 0
    // Predicated region
    $region2: #{tpu_custom_call.1} parent=1 // pred_check
      _
    $region3: #{tpu_custom_call.1} parent=1 // pred_check_branch
      %10 = sbr.rel (0) target = $region5
    $region4: #{tpu_custom_call.1} parent=1 // pred_region
      _
    $region5: #{tpu_custom_call.1} parent=1 // pred_fallthru
      _
    // Predicated region
    $region6: #{tpu_custom_call.1} parent=1 // pred_check
      _
    $region7: #{tpu_custom_call.1} parent=1 // pred_check_branch
      %12 = sbr.rel (0) target = $region9
    $region8: #{tpu_custom_call.1} parent=1 // pred_region
      _
    $region9: #{tpu_custom_call.1} parent=1 // pred_fallthru
      _
    // Predicated region
    $region10: #{tpu_custom_call.1} parent=1 // pred_check
      _
    $region11: #{tpu_custom_call.1} parent=1 // pred_check_branch
      %14 = sbr.rel (0) target = $region13
    $region12: #{tpu_custom_call.1} parent=1 // pred_region
      _
    $region13: #{tpu_custom_call.1} parent=1 // pred_fallthru
      _
    %v15 = vld [vmem:[%s1] sm:$0xff]
    %v16 = vld [vmem:[%s2] sm:$0xff]
    %v17 = vld [vmem:[%s2 + $0x8] sm:$0xff]
    %v18 = vld [vmem:[%s2 + $0x10] sm:$0xff]
    %v19 = vld [vmem:[%s2 + $0x18] sm:$0xff]
    %v20 = vld [vmem:[%s2 + $0x20] sm:$0xff]
    %v21 = vld [vmem:[%s2 + $0x28] sm:$0xff]
    %v22 = vld [vmem:[%s2 + $0x30] sm:$0xff]
    %v23 = vld [vmem:[%s2 + $0x38] sm:$0xff]
    %v24 = vld [vmem:[%s2 + $0x40] sm:$0xff]
    %v25 = vld [vmem:[%s2 + $0x48] sm:$0xff]
    %v26 = vld [vmem:[%s2 + $0x50] sm:$0xff]
    %v27 = vld [vmem:[%s2 + $0x58] sm:$0xff]
    %v28 = vld [vmem:[%s2 + $0x60] sm:$0xff]
    %v29 = vld [vmem:[%s2 + $0x68] sm:$0xff]
    %v30 = vld [vmem:[%s2 + $0x70] sm:$0xff]
    %v31 = vld [vmem:[%s2 + $0x78] sm:$0xff]
    %vm32 = vcmask 261120
    %v34 = vsel %vm32, %v15, 0
    %v37 = vsel %vm32, %v16, 0
    %v40 = vsel %vm32, %v17, 0
    %v43 = vsel %vm32, %v18, 0
    %v46 = vsel %vm32, %v19, 0
    %v49 = vsel %vm32, %v20, 0
    %v52 = vsel %vm32, %v21, 0
    %v55 = vsel %vm32, %v22, 0
    %v58 = vsel %vm32, %v23, 0
    %v61 = vsel %vm32, %v24, 0
    %v64 = vsel %vm32, %v25, 0
    %v67 = vsel %vm32, %v26, 0
    %v70 = vsel %vm32, %v27, 0
    %v73 = vsel %vm32, %v28, 0
    %v76 = vsel %vm32, %v29, 0
    %v79 = vsel %vm32, %v30, 0
    %v82 = vsel %vm32, %v31, 0
    %84 = vmatprep.subr.mxu0 0.0
    %85 = vmatpush1.xpose.msra.mxu0 %v37
    %86 = vmatprep.subr.mxu0 0.0
    %87 = vmatpush1.xpose.msra.mxu0 %v40
    %88 = vmatprep.subr.mxu0 0.0
    %89 = vmatpush1.xpose.msra.mxu0 %v43
    %90 = vmatprep.subr.mxu0 0.0
    %91 = vmatpush1.xpose.msra.mxu0 %v46
    %92 = vmatprep.subr.mxu0 0.0
    %93 = vmatpush1.xpose.msra.mxu0 %v49
    %94 = vmatprep.subr.mxu0 0.0
    %95 = vmatpush1.xpose.msra.mxu0 %v52
    %96 = vmatprep.subr.mxu0 0.0
    %97 = vmatpush1.xpose.msra.mxu0 %v55
    %98 = vmatprep.subr.mxu0 0.0
    %99 = vmatpush1.xpose.msra.mxu0 %v58
    %100 = vmatprep.subr.mxu0 0.0
    %101 = vmatpush1.xpose.msra.mxu0 %v61
    %102 = vmatprep.subr.mxu0 0.0
    %103 = vmatpush1.xpose.msra.mxu0 %v64
    %104 = vmatprep.subr.mxu0 0.0
    %105 = vmatpush1.xpose.msra.mxu0 %v67
    %106 = vmatprep.subr.mxu0 0.0
    %107 = vmatpush1.xpose.msra.mxu0 %v70
    %108 = vmatprep.subr.mxu0 0.0
    %109 = vmatpush1.xpose.msra.mxu0 %v73
    %110 = vmatprep.subr.mxu0 0.0
    %111 = vmatpush1.xpose.msra.mxu0 %v76
    %112 = vmatprep.subr.mxu0 0.0
    %113 = vmatpush1.xpose.msra.mxu0 %v79
    %114 = vmatprep.subr.mxu0 0.0
    %115 = vmatpush1.xpose.msra.mxu0 %v82
    %116 = vmatprep.subr.mxu0 0.0
    %117 = vmatpush1.xpose.msra.mxu0 0.0
    %118 = vmatprep.subr.mxu0 0.0
    %119 = vmatpush1.xpose.msra.mxu0 0.0
    %120 = vmatprep.subr.mxu0 0.0
    %121 = vmatpush1.xpose.msra.mxu0 0.0
    %122 = vmatprep.subr.mxu0 0.0
    %123 = vmatpush1.xpose.msra.mxu0 0.0
    %124 = vmatprep.subr.mxu0 0.0
    %125 = vmatpush1.xpose.msra.mxu0 0.0
    %126 = vmatprep.subr.mxu0 0.0
    %127 = vmatpush1.xpose.msra.mxu0 0.0
    %128 = vmatprep.subr.mxu0 0.0
    %129 = vmatpush1.xpose.msra.mxu0 0.0
    %130 = vmatprep.subr.mxu0 0.0
    %131 = vmatpush1.xpose.msra.mxu0 0.0
    %132 = vmatprep.subr.mxu0 0.0
    %133 = vmatpush1.xpose.msra.mxu0 0.0
    %134 = vmatprep.subr.mxu0 0.0
    %135 = vmatpush1.xpose.msra.mxu0 0.0
    %136 = vmatprep.subr.mxu0 0.0
    %137 = vmatpush1.xpose.msra.mxu0 0.0
    %138 = vmatprep.subr.mxu0 0.0
    %139 = vmatpush1.xpose.msra.mxu0 0.0
    %140 = vmatprep.subr.mxu0 0.0
    %141 = vmatpush1.xpose.msra.mxu0 0.0
    %142 = vmatprep.subr.mxu0 0.0
    %143 = vmatpush1.xpose.msra.mxu0 0.0
    %144 = vmatprep.subr.mxu0 0.0
    %145 = vmatpush1.xpose.msra.mxu0 0.0
    %146 = vmatprep.subr.mxu0 0.0
    %147 = vmatpush1.xpose.msra.mxu0 0.0
    %148 = vmatprep.mubr.f32.mxu0 0.0
    %149 = vmatmul.mubr.f32.gmra.mrb[0].mxu0 %v34
    %v150 = vpop.f32.mrb[0].mxu0
    %v151 = vadd.f32 0.0, %v150
    %v152 = vpop.f32.mrb[0].mxu0
    %153 = vdwg.mxu0
    %v154 = vld [vmem:[%s0] sm:$0xff]
    %s155 = smul.u32 0, 128
    %v156 = vstv %s155
    %v157 = vsub.s32 %v154, %v156
    %vm158 = vcmp.ge.s32.totalorder %v157, 0
    %vm159 = vcmp.lt.s32.totalorder %v157, 128
    %vm160 = vmand %vm158, %vm159
    %v161 = vsel %vm160, 1.0, 0.0
    %vm162 = vcmask 7168
    %v163 = vsel %vm162, %v161, -inf
    %164 = vmax.xlane.f32.xlu0 %v163
    %v165 = vpop.xlane.xlu0 %164
    %v166 = vrot.slane %v165, 4
    %v167 = vmax.f32 %v165, %v166
    %v168 = vrot.slane %v167, 2
    %v169 = vmax.f32 %v167, %v168
    %v170 = vrot.slane %v169, 1
    %v171 = vmax.f32 %v169, %v170
    %s172 = vtos %v171
    %p173 = scmp.gt.f32.partialorder %s172, 0.0
    // Predicated region
    $region14: #{tpu_custom_call.1} parent=1 // pred_check
      %p174 = pneg %p173
    $region15: #{tpu_custom_call.1} parent=1 // pred_check_branch
      %176 = sbr.rel (%p174) target = $region17
    $region16: #{tpu_custom_call.1} parent=1 // pred_region
      %v177 = vlaneseq
      %v178 = vand.u32 %v177, 127
      %179 = vset.pattern.permute.xlu0 0
      %180 = vperm.xlu0 %179, %v157
      %v181 = vpop.permute.xlu0 %180
      %vm182 = vcmp.eq.s32.totalorder %v178, %v181
      %v183 = vsel %vm182, %v151, 0.0
      %184 = vadd.xlane.f32.xlu0 %v183
      %v185 = vpop.xlane.xlu0 %184
      %v186 = vmul.f32 %v185, %v185
      %v187 = vsub.f32 1.0, %v186
      %v188 = vmax.f32 %v187, 0.0
      %v189 = vrsqrt.pop %v188
      %v190 = vmul.f32 %v188, %v189
      %vm191 = vcmp.eq.f32.partialorder %v188, inf
      %v192 = vsel %vm191, %v188, %v190
      %vm193 = vcmp.eq.f32.partialorder %v188, 0.0
      %v194 = vand.u32 %v188, 2147483648
      %v195 = vsel %vm193, %v194, %v192
      %v196 = vmul.f32 %v185, 0.87758255
      %v197 = vmul.f32 %v195, 0.47942555
      %v198 = vsub.f32 %v196, %v197
      %vm199 = vcmp.gt.f32.partialorder %v185, -0.87758255
      %v200 = vsub.f32 %v185, 0.23971277
      %v201 = vsel %vm199, %v198, %v200
      %v202 = vsel %vm182, %v201, %v151
      %v203 = vmul.f32 %v202, 30.0
      %204 = vst [vmem:[#allocation2] sm:$0xff] %v203
    $region17: #{tpu_custom_call.1} parent=1 // pred_fallthru
      _
    %p205 = pneg %p173
    // Predicated region
    $region18: #{tpu_custom_call.1} parent=1 // pred_check
      _
    $region19: #{tpu_custom_call.1} parent=1 // pred_check_branch
      %207 = sbr.rel (%p173) target = $region21
    $region20: #{tpu_custom_call.1} parent=1 // pred_region
      %v208 = vmul.f32 %v151, 30.0
      %209 = vst [vmem:[#allocation2] sm:$0xff] %v208
    $region21: #{tpu_custom_call.1} parent=1 // pred_fallthru
      _
    // Predicated region
    $region22: #{tpu_custom_call.1} parent=1 // pred_check
      _
    $region23: #{tpu_custom_call.1} parent=1 // pred_check_branch
      %211 = sbr.rel (0) target = $region25
    $region24: #{tpu_custom_call.1} parent=1 // pred_region
      %s213 = ssub.s32 128, 128
      %214 = vsyncadd [#allocation3], %s213
      %s216 = sshll.u32 [#allocation2], 4
      %s217 = int_to_ptr.vmem [resolvable:$true] %s216
      %219 = dma.vmem_to_hbm [thread:$0]  %s217, 128, %s3, [#allocation3]
    $region25: #{tpu_custom_call.1} parent=1 // pred_fallthru
      _
    // Predicated region
    $region26: #{tpu_custom_call.1} parent=1 // pred_check
      _
    $region27: #{tpu_custom_call.1} parent=1 // pred_check_branch
      %221 = sbr.rel (0) target = $region29
    $region28: #{tpu_custom_call.1} parent=1 // pred_region
      %222 = dma.done [#allocation3], 128
    $region29: #{tpu_custom_call.1} parent=1 // pred_fallthru
      _
    %223 = vsyncpa [#allocation3], 1

</llo_original>
